<compile_context>
chip_gen: v5e
topology: v5e:2x2
jax: 0.10.0
libtpu: 0.0.40
codegen_flags: <defaults>
</compile_context>

<pallas_src>
import functools

import jax
import jax.numpy as jnp
from jax.experimental import pallas as pl
from jax.experimental.pallas import tpu as pltpu

_LANE = 128    # TPU lane width (last dim)
_SUBLANE = 8   # TPU sublane width (second-last dim, f32)


def _round_up(n: int, m: int) -> int:
    return ((n + m - 1) // m) * m


def _fused_mlp_kernel(*refs, num_hidden: int):
    """refs = (x, w0, b0, ..., w_{H-1}, b_{H-1}, w_outT, b_out_smem, o).

    Hidden layers run back-to-back on one VMEM-resident batch tile with ReLU;
    fc_out is a transposed-RHS matmul producing a lane-dense (1, tile_b) row.
    """
    x_ref = refs[0]
    o_ref = refs[-1]
    h = x_ref[...]                                     # (tile_b, In)
    for i in range(num_hidden):
        w = refs[1 + 2 * i][...]                       # (InP_i, OutP_i)
        b = refs[2 + 2 * i][...]                       # (1, OutP_i) -> broadcasts
        h = jnp.maximum(
            jnp.dot(h, w, preferred_element_type=jnp.float32) + b, 0.0)
    w_out_t = refs[1 + 2 * num_hidden][...]            # (8, HP): row 0 is real
    b_out = refs[2 + 2 * num_hidden][0]                # scalar bias from SMEM
    # (8, HP) x (tile_b, HP)^T -> (8, tile_b); row 0 is fc_out's output for the
    # whole tile.  Stored as (1, tile_b): compact, lane-dense HBM writeback.
    o = pl.dot(w_out_t, h, trans_b=True)
    o_ref[...] = (o[0:1, :] + b_out).astype(o_ref.dtype)


def pack_params(params):
    """Pack (w: (In, Out), b: (Out,)) layers for the fused kernel.

    Hidden layers: weight (In_or_InP, OutP), bias (1, OutP), OutP = ceil128(Out);
    layer-0 keeps its raw input dim (x is not lane-padded).  Final fc_out layer
    is stored TRANSPOSED as (8, HP) with the real weight in row 0, and its bias
    as a (1,) scalar (read from SMEM).  Zero padding keeps the math identical
    (padded columns stay exactly 0 through ReLU).
    """
    num_hidden = len(params) - 1
    packed = []
    prev_out_p = params[0][0].shape[0]        # raw input width (layer-0 K dim)
    for i in range(num_hidden):
        w, b = params[i]
        din, dout = w.shape
        din_p = din if i == 0 else prev_out_p
        dout_p = _round_up(dout, _LANE)
        wp = jnp.zeros((din_p, dout_p), jnp.float32).at[:din, :dout].set(w)
        bp = jnp.zeros((1, dout_p), jnp.float32).at[0, :dout].set(b)
        packed.append((wp, bp))
        prev_out_p = dout_p
    w_out, b_out = params[-1]                 # (H_last, 1), (1,)
    hin = w_out.shape[0]
    w_out_t = jnp.zeros((_SUBLANE, prev_out_p), jnp.float32).at[0, :hin].set(
        w_out[:, 0])
    b_out_s = jnp.asarray(b_out, jnp.float32).reshape((1,))
    packed.append((w_out_t, b_out_s))
    return packed


def simple_regression_forward(x, packed_params):
    """x: (B, input_size) -> (B, 1).  packed_params from pack_params()."""
    B, In = x.shape
    num_hidden = len(packed_params) - 1
    w_out_t, b_out = packed_params[-1]

    # Batch tiling: big lane-dense tiles (<=512 rows) to amortize per-grid-step
    # overhead; at large batch keep >=2 grid steps so the "parallel" axis can
    # shard across v7x's two TensorCores.  Per-tile VMEM stays ~1 MiB.
    Bp = _round_up(B, _SUBLANE)
    if Bp <= 128:
        tile_b = Bp
    else:
        tile_b = min(512, max(128, _round_up(pl.cdiv(Bp, 2), 128)))
        Bp = _round_up(Bp, tile_b)

    if Bp != B:
        xp = jnp.zeros((Bp, In), jnp.float32).at[:B, :].set(x)
    else:
        xp = x.astype(jnp.float32)

    in_specs = [pl.BlockSpec((tile_b, In), lambda i: (i, 0))]
    flat_args = [xp]
    for wp, bp in packed_params[:-1]:
        # Constant block index -> weights/biases stay VMEM-resident across the
        # batch grid (DMA'd once per pallas_call, not per batch tile).
        in_specs.append(pl.BlockSpec(wp.shape, lambda i: (0, 0)))
        in_specs.append(pl.BlockSpec(bp.shape, lambda i: (0, 0)))
        flat_args.extend((wp, bp))
    in_specs.append(pl.BlockSpec(w_out_t.shape, lambda i: (0, 0)))
    in_specs.append(pl.BlockSpec(memory_space=pltpu.MemorySpace.SMEM))
    flat_args.extend((w_out_t, b_out))

    # Advisory cost hint for XLA's scheduler.
    flops = 0
    weight_bytes = 0
    for wp, bp in packed_params[:-1]:
        flops += 2 * Bp * wp.shape[0] * wp.shape[1]
        weight_bytes += 4 * (wp.size + bp.size)
    flops += 2 * Bp * w_out_t.shape[1]
    weight_bytes += 4 * (w_out_t.size + b_out.size)
    bytes_accessed = 4 * (Bp * In + Bp) + weight_bytes

    out = pl.pallas_call(
        functools.partial(_fused_mlp_kernel, num_hidden=num_hidden),
        out_shape=jax.ShapeDtypeStruct((1, Bp), jnp.float32),
        grid=(Bp // tile_b,),
        in_specs=in_specs,
        out_specs=pl.BlockSpec((1, tile_b), lambda i: (0, i)),
        compiler_params=pltpu.CompilerParams(
            dimension_semantics=("parallel",)),
        cost_estimate=pl.CostEstimate(
            flops=int(flops),
            transcendentals=0,
            bytes_accessed=int(bytes_accessed)),
    )(*flat_args)

    # Strip batch padding; fc_out produces a single value per row.
    return out[0, :B].reshape(B, 1)


def init_params(key, input_size, hidden_sizes, gain=0.02):
    """init_weights(init_type='normal', gain): N(0, gain) weights, zero biases."""
    sizes = [input_size] + list(hidden_sizes) + [1]
    params = []
    for i in range(len(sizes) - 1):
        key, wk = jax.random.split(key)
        w = gain * jax.random.normal(wk, (sizes[i], sizes[i + 1]), jnp.float32)
        b = jnp.zeros((sizes[i + 1],), jnp.float32)
        params.append((w, b))
    return params


if __name__ == "__main__":
    # opt-equivalent hyperparameters (small, deterministic)
    kdtree_num_samples = 16
    input_size = kdtree_num_samples * 6      # 96
    hidden_sizes = [32, 32]                  # opt.hlayer_sizes
    batch = 8

    key = jax.random.PRNGKey(0)
    key, xk = jax.random.split(key)
    x = jax.random.normal(xk, (batch, input_size), jnp.float32)

    params = init_params(key, input_size, hidden_sizes, gain=0.02)
    packed = pack_params(params)             # one-time packing

    fwd = jax.jit(simple_regression_forward)
    out = jax.block_until_ready(fwd(x, packed))

    # Plain-JAX reference (unpadded params)
    ref = x
    for w, b in params[:-1]:
        ref = jnp.maximum(ref @ w + b, 0.0)
    ref = ref @ params[-1][0] + params[-1][1]

    assert out.shape == (batch, 1), out.shape
    assert jnp.allclose(out, ref, atol=1e-5, rtol=1e-5), float(
        jnp.max(jnp.abs(out - ref)))

    print("KERNEL_OK")
</pallas_src>

<mosaic_0001>
module attributes {stable_mosaic.version = 11 : i64} {
  func.func @_fused_mlp_kernel(%arg0: i32, %arg1: memref<8x96xf32, #tpu.memory_space<vmem>>, %arg2: memref<96x128xf32, #tpu.memory_space<vmem>>, %arg3: memref<1x128xf32, #tpu.memory_space<vmem>>, %arg4: memref<128x128xf32, #tpu.memory_space<vmem>>, %arg5: memref<1x128xf32, #tpu.memory_space<vmem>>, %arg6: memref<8x128xf32, #tpu.memory_space<vmem>>, %arg7: memref<1xf32, #tpu.memory_space<smem>>, %arg8: memref<1x8xf32, #tpu.memory_space<vmem>>) attributes {dimension_semantics = [#tpu.dimension_semantics<parallel>], iteration_bounds = array<i64: 1>, scalar_prefetch = 0 : i64, scratch_operands = 0 : i64, tpu.core_type = #tpu.core_type<tc>, window_params = [{transform_indices = @transform_0, window_bounds = array<i64: 8, 96>}, {pipeline_mode = #tpu.pipeline_mode<synchronous>, transform_indices = @transform_1, window_bounds = array<i64: 96, 128>}, {pipeline_mode = #tpu.pipeline_mode<synchronous>, transform_indices = @transform_2, window_bounds = array<i64: 1, 128>}, {pipeline_mode = #tpu.pipeline_mode<synchronous>, transform_indices = @transform_3, window_bounds = array<i64: 128, 128>}, {pipeline_mode = #tpu.pipeline_mode<synchronous>, transform_indices = @transform_4, window_bounds = array<i64: 1, 128>}, {pipeline_mode = #tpu.pipeline_mode<synchronous>, transform_indices = @transform_5, window_bounds = array<i64: 8, 128>}, {transform_indices = @transform_6, window_bounds = array<i64: 1>}, {transform_indices = @transform_7, window_bounds = array<i64: 1, 8>}]} {
    %c0 = arith.constant 0 : index
    %c0_0 = arith.constant 0 : index
    %0 = vector.load %arg1[%c0, %c0_0] : memref<8x96xf32, #tpu.memory_space<vmem>>, vector<8x96xf32>
    %c0_1 = arith.constant 0 : index
    %c0_2 = arith.constant 0 : index
    %1 = vector.load %arg2[%c0_1, %c0_2] : memref<96x128xf32, #tpu.memory_space<vmem>>, vector<96x128xf32>
    %c0_3 = arith.constant 0 : index
    %c0_4 = arith.constant 0 : index
    %2 = vector.load %arg3[%c0_3, %c0_4] : memref<1x128xf32, #tpu.memory_space<vmem>>, vector<1x128xf32>
    %cst = arith.constant dense<0.000000e+00> : vector<8x128xf32>
    %3 = tpu.matmul %0, %1, %cst {dimension_numbers = #tpu.dot_dimension_numbers<[1], [0], [0], [1], [0, 0, 1, 1], [], []>} : vector<8x96xf32>, vector<96x128xf32>, vector<8x128xf32> -> vector<8x128xf32>
    %4 = vector.broadcast %2 : vector<1x128xf32> to vector<8x128xf32>
    %5 = arith.addf %3, %4 : vector<8x128xf32>
    %cst_5 = arith.constant 0.000000e+00 : f32
    %6 = vector.broadcast %cst_5 : f32 to vector<8x128xf32>
    %7 = arith.maximumf %5, %6 : vector<8x128xf32>
    %c0_6 = arith.constant 0 : index
    %c0_7 = arith.constant 0 : index
    %8 = vector.load %arg4[%c0_6, %c0_7] : memref<128x128xf32, #tpu.memory_space<vmem>>, vector<128x128xf32>
    %c0_8 = arith.constant 0 : index
    %c0_9 = arith.constant 0 : index
    %9 = vector.load %arg5[%c0_8, %c0_9] : memref<1x128xf32, #tpu.memory_space<vmem>>, vector<1x128xf32>
    %cst_10 = arith.constant dense<0.000000e+00> : vector<8x128xf32>
    %10 = tpu.matmul %7, %8, %cst_10 {dimension_numbers = #tpu.dot_dimension_numbers<[1], [0], [0], [1], [0, 0, 1, 1], [], []>} : vector<8x128xf32>, vector<128x128xf32>, vector<8x128xf32> -> vector<8x128xf32>
    %11 = vector.broadcast %9 : vector<1x128xf32> to vector<8x128xf32>
    %12 = arith.addf %10, %11 : vector<8x128xf32>
    %cst_11 = arith.constant 0.000000e+00 : f32
    %13 = vector.broadcast %cst_11 : f32 to vector<8x128xf32>
    %14 = arith.maximumf %12, %13 : vector<8x128xf32>
    %c0_12 = arith.constant 0 : index
    %c0_13 = arith.constant 0 : index
    %15 = vector.load %arg6[%c0_12, %c0_13] : memref<8x128xf32, #tpu.memory_space<vmem>>, vector<8x128xf32>
    %c0_14 = arith.constant 0 : index
    %16 = memref.load %arg7[%c0_14] : memref<1xf32, #tpu.memory_space<smem>>
    %cst_15 = arith.constant dense<0.000000e+00> : vector<8x8xf32>
    %17 = tpu.matmul %15, %14, %cst_15 {dimension_numbers = #tpu.dot_dimension_numbers<[1], [1], [0], [0], [0, 0, 1, 0], [], []>} : vector<8x128xf32>, vector<8x128xf32>, vector<8x8xf32> -> vector<8x8xf32>
    %18 = vector.extract_strided_slice %17 {offsets = [0, 0], sizes = [1, 8], strides = [1, 1]} : vector<8x8xf32> to vector<1x8xf32>
    %19 = vector.broadcast %16 : f32 to vector<1x8xf32>
    %20 = arith.addf %18, %19 : vector<1x8xf32>
    %c0_16 = arith.constant 0 : index
    %c0_17 = arith.constant 0 : index
    %21 = vector.load %arg8[%c0_16, %c0_17] : memref<1x8xf32, #tpu.memory_space<vmem>>, vector<1x8xf32>
    tpu.vector_store %arg8[%c0_16, %c0_17], %20 {strides = array<i32>} : memref<1x8xf32, #tpu.memory_space<vmem>>, vector<1x8xf32>,
    return
  }
  func.func @transform_0(%arg0: i32) -> (i32, i32) {
    %c0_i32 = arith.constant 0 : i32
    %c0_i32_0 = arith.constant 0 : i32
    return %arg0, %c0_i32 : i32, i32
  }
  func.func @transform_1(%arg0: i32) -> (i32, i32) {
    %c0_i32 = arith.constant 0 : i32
    %c0_i32_0 = arith.constant 0 : i32
    %c0_i32_1 = arith.constant 0 : i32
    return %c0_i32, %c0_i32_0 : i32, i32
  }
  func.func @transform_2(%arg0: i32) -> (i32, i32) {
    %c0_i32 = arith.constant 0 : i32
    %c0_i32_0 = arith.constant 0 : i32
    %c0_i32_1 = arith.constant 0 : i32
    return %c0_i32, %c0_i32_0 : i32, i32
  }
  func.func @transform_3(%arg0: i32) -> (i32, i32) {
    %c0_i32 = arith.constant 0 : i32
    %c0_i32_0 = arith.constant 0 : i32
    %c0_i32_1 = arith.constant 0 : i32
    return %c0_i32, %c0_i32_0 : i32, i32
  }
  func.func @transform_4(%arg0: i32) -> (i32, i32) {
    %c0_i32 = arith.constant 0 : i32
    %c0_i32_0 = arith.constant 0 : i32
    %c0_i32_1 = arith.constant 0 : i32
    return %c0_i32, %c0_i32_0 : i32, i32
  }
  func.func @transform_5(%arg0: i32) -> (i32, i32) {
    %c0_i32 = arith.constant 0 : i32
    %c0_i32_0 = arith.constant 0 : i32
    %c0_i32_1 = arith.constant 0 : i32
    return %c0_i32, %c0_i32_0 : i32, i32
  }
  func.func @transform_6(%arg0: i32) -> i32 {
    %c0_i32 = arith.constant 0 : i32
    %c0_i32_0 = arith.constant 0 : i32
    return %c0_i32 : i32
  }
  func.func @transform_7(%arg0: i32) -> (i32, i32) {
    %c0_i32 = arith.constant 0 : i32
    %c0_i32_0 = arith.constant 0 : i32
    return %c0_i32, %arg0 : i32, i32
  }
}

</mosaic_0001>

<llo_original>
// kernel: simple_regression_forward.1
$region0: #{simple_regression_forward.1}
  #allocation0 [shape = 'u32[]', space=smem, size = 0x4, offset = 0x4, fixed_abs, tag = 'smem constant byte address 0x4 - core index']
  #allocation1 [shape = 'u32[72,128]{1,0:T(1,128)}', space=vmem, size = 0x9000, scoped, tag = 'internal scratch']
  #allocation2 [shape = 'f32[1]{0:T(128)S(6)}', space=smem, size = 0x200, scoped, tag = 'scoped memory for simple_regression_forward.1']
  %s0 = inlined_call_operand.hbm [shape: f32[8,96], index: 0, kind: input, shape index: {}]
  %s1 = inlined_call_operand.hbm [shape: f32[96,128], index: 1, kind: input, shape index: {}]
  %s2 = inlined_call_operand.vmem [shape: f32[1,128], index: 2, kind: input, shape index: {}]
  %s3 = inlined_call_operand.hbm [shape: f32[128,128], index: 3, kind: input, shape index: {}]
  %s4 = inlined_call_operand.vmem [shape: f32[1,128], index: 4, kind: input, shape index: {}]
  %s5 = inlined_call_operand.hbm [shape: f32[8,128], index: 5, kind: input, shape index: {}]
  %s6 = inlined_call_operand.<no memory space> [shape: f32[1], index: 6, kind: input, shape index: {}]
  %s7 = inlined_call_operand.hbm [shape: f32[1,8], index: 7, kind: output, shape index: {}]
  %s8 = sld [smem:[#allocation0]]
  $region54: #{simple_regression_forward.1} parent=0
    _
  %s10 = ssub.s32 1, %s8
  %s11 = scalar_select 0, %s10, %s8
  %12 = sst [smem:[#allocation2]] %s6
  $region1: #{simple_regression_forward.1} parent=0
    #allocation3 [shape = 'u8[4096]{0}', space=vmem, size = 0x1000, scoped, tag = 'input window, operand 0, single buffered']
    #allocation4 [shape = 's32[1]{0}', space=sflag, size = 0x4, scoped, tag = 'scoped memory for simple_regression_forward.1']
    #allocation5 [shape = 's32[1]{0}', space=sflag, size = 0x4, scoped, tag = 'scoped memory for simple_regression_forward.1']
    #allocation6 [shape = 'u8[49152]{0}', space=vmem, size = 0xc000, scoped, tag = 'input window, operand 1, single buffered']
    #allocation7 [shape = 's32[1]{0}', space=sflag, size = 0x4, scoped, tag = 'scoped memory for simple_regression_forward.1']
    #allocation8 [shape = 'u8[65536]{0}', space=vmem, size = 0x10000, scoped, tag = 'input window, operand 3, single buffered']
    #allocation9 [shape = 'u8[4096]{0}', space=vmem, size = 0x1000, scoped, tag = 'input window, operand 5, single buffered']
    #allocation10 [shape = 's32[1]{0}', space=sflag, size = 0x4, scoped, tag = 'scoped memory for simple_regression_forward.1']
    #allocation11 [shape = 'u8[512]{0}', space=vmem, size = 0x400, scoped, tag = 'output window, operand 0, single buffered']
    %13 = vsyncpa [#allocation4], 0
    %14 = vsyncpa [#allocation7], 0
    %15 = vsyncpa [#allocation10], 0
    %16 = vsyncpa [#allocation5], 0
    // Predicated region
    $region2: #{simple_regression_forward.1} parent=1 // pred_check
      _
    $region3: #{simple_regression_forward.1} parent=1 // pred_check_branch
      %18 = sbr.rel (0) target = $region5
    $region4: #{simple_regression_forward.1} parent=1 // pred_region
      %20 = vsyncadd [#allocation4], 0
      %s22 = sshll.u32 %s0, 4
      %s23 = int_to_ptr.hbm [resolvable:$true] %s22
      %s24 = sshll.u32 [#allocation3], 4
      %s25 = int_to_ptr.vmem [resolvable:$true] %s24
      %27 = dma.hbm_to_vmem [thread:$0]  %s23, 128, %s25, [#allocation4]
    $region5: #{simple_regression_forward.1} parent=1 // pred_fallthru
      _
    // Predicated region
    $region6: #{simple_regression_forward.1} parent=1 // pred_check
      _
    $region7: #{simple_regression_forward.1} parent=1 // pred_check_branch
      %29 = sbr.rel (0) target = $region9
    $region8: #{simple_regression_forward.1} parent=1 // pred_region
      %31 = vsyncadd [#allocation7], 0
      %s32 = sshll.u32 %s1, 4
      %s33 = int_to_ptr.hbm [resolvable:$true] %s32
      %s34 = sshll.u32 [#allocation6], 4
      %s35 = int_to_ptr.vmem [resolvable:$true] %s34
      %40 = dma.hbm_to_vmem [thread:$0]  %s33, 1536, %s35, [#allocation7], 128, 128, 8
    $region9: #{simple_regression_forward.1} parent=1 // pred_fallthru
      _
    // Predicated region
    $region10: #{simple_regression_forward.1} parent=1 // pred_check
      _
    $region11: #{simple_regression_forward.1} parent=1 // pred_check_branch
      %42 = sbr.rel (0) target = $region13
    $region12: #{simple_regression_forward.1} parent=1 // pred_region
      _
    $region13: #{simple_regression_forward.1} parent=1 // pred_fallthru
      _
    // Predicated region
    $region14: #{simple_regression_forward.1} parent=1 // pred_check
      _
    $region15: #{simple_regression_forward.1} parent=1 // pred_check_branch
      %44 = sbr.rel (0) target = $region17
    $region16: #{simple_regression_forward.1} parent=1 // pred_region
      %46 = vsyncadd [#allocation7], 0
      %s47 = sshll.u32 %s3, 4
      %s48 = int_to_ptr.hbm [resolvable:$true] %s47
      %s49 = sshll.u32 [#allocation8], 4
      %s50 = int_to_ptr.vmem [resolvable:$true] %s49
      %55 = dma.hbm_to_vmem [thread:$0]  %s48, 2048, %s50, [#allocation7], 128, 128, 8
    $region17: #{simple_regression_forward.1} parent=1 // pred_fallthru
      _
    // Predicated region
    $region18: #{simple_regression_forward.1} parent=1 // pred_check
      _
    $region19: #{simple_regression_forward.1} parent=1 // pred_check_branch
      %57 = sbr.rel (0) target = $region21
    $region20: #{simple_regression_forward.1} parent=1 // pred_region
      _
    $region21: #{simple_regression_forward.1} parent=1 // pred_fallthru
      _
    // Predicated region
    $region22: #{simple_regression_forward.1} parent=1 // pred_check
      _
    $region23: #{simple_regression_forward.1} parent=1 // pred_check_branch
      %59 = sbr.rel (0) target = $region25
    $region24: #{simple_regression_forward.1} parent=1 // pred_region
      %61 = vsyncadd [#allocation10], 0
      %s63 = sshll.u32 %s5, 4
      %s64 = int_to_ptr.hbm [resolvable:$true] %s63
      %s65 = sshll.u32 [#allocation9], 4
      %s66 = int_to_ptr.vmem [resolvable:$true] %s65
      %68 = dma.hbm_to_vmem [thread:$0]  %s64, 128, %s66, [#allocation10]
    $region25: #{simple_regression_forward.1} parent=1 // pred_fallthru
      _
    // Predicated region
    $region26: #{simple_regression_forward.1} parent=1 // pred_check
      _
    $region27: #{simple_regression_forward.1} parent=1 // pred_check_branch
      %70 = sbr.rel (0) target = $region29
    $region28: #{simple_regression_forward.1} parent=1 // pred_region
      _
    $region29: #{simple_regression_forward.1} parent=1 // pred_fallthru
      _
    // Predicated region
    $region30: #{simple_regression_forward.1} parent=1 // pred_check
      _
    $region31: #{simple_regression_forward.1} parent=1 // pred_check_branch
      %72 = sbr.rel (0) target = $region33
    $region32: #{simple_regression_forward.1} parent=1 // pred_region
      %74 = dma.done [#allocation4], 128
    $region33: #{simple_regression_forward.1} parent=1 // pred_fallthru
      _
    // Predicated region
    $region34: #{simple_regression_forward.1} parent=1 // pred_check
      _
    $region35: #{simple_regression_forward.1} parent=1 // pred_check_branch
      %76 = sbr.rel (0) target = $region37
    $region36: #{simple_regression_forward.1} parent=1 // pred_region
      %78 = dma.done [#allocation7], 1536
    $region37: #{simple_regression_forward.1} parent=1 // pred_fallthru
      _
    // Predicated region
    $region38: #{simple_regression_forward.1} parent=1 // pred_check
      _
    $region39: #{simple_regression_forward.1} parent=1 // pred_check_branch
      %80 = sbr.rel (0) target = $region41
    $region40: #{simple_regression_forward.1} parent=1 // pred_region
      %82 = dma.done [#allocation7], 2048
    $region41: #{simple_regression_forward.1} parent=1 // pred_fallthru
      _
    // Predicated region
    $region42: #{simple_regression_forward.1} parent=1 // pred_check
      _
    $region43: #{simple_regression_forward.1} parent=1 // pred_check_branch
      %84 = sbr.rel (0) target = $region45
    $region44: #{simple_regression_forward.1} parent=1 // pred_region
      %86 = dma.done [#allocation10], 128
    $region45: #{simple_regression_forward.1} parent=1 // pred_fallthru
      _
    %v87 = vld [vmem:[#allocation3] sm:$0xff]
    %v88 = vld [vmem:[#allocation6] sm:$0xff]
    %v89 = vld [vmem:[#allocation6 + $0x8] sm:$0xff]
    %v90 = vld [vmem:[#allocation6 + $0x10] sm:$0xff]
    %v91 = vld [vmem:[#allocation6 + $0x18] sm:$0xff]
    %v92 = vld [vmem:[#allocation6 + $0x20] sm:$0xff]
    %v93 = vld [vmem:[#allocation6 + $0x28] sm:$0xff]
    %v94 = vld [vmem:[#allocation6 + $0x30] sm:$0xff]
    %v95 = vld [vmem:[#allocation6 + $0x38] sm:$0xff]
    %v96 = vld [vmem:[#allocation6 + $0x40] sm:$0xff]
    %v97 = vld [vmem:[#allocation6 + $0x48] sm:$0xff]
    %v98 = vld [vmem:[#allocation6 + $0x50] sm:$0xff]
    %v99 = vld [vmem:[#allocation6 + $0x58] sm:$0xff]
    %v100 = vld [vmem:[%s2] sm:$0x1]
    %v102 = vperm.slane %v100, 0
    %vm104 = vcmask 785408
    %v106 = vsel %vm104, %v87, 0
    %108 = vmatpush.msra.mxu0 0.0
    %109 = vmatpush.msra.mxu0 0.0
    %110 = vmatpush.msra.mxu0 0.0
    %111 = vmatpush.msra.mxu0 0.0
    %112 = vmatpush.msra.mxu0 %v99
    %113 = vmatpush.msra.mxu0 %v98
    %114 = vmatpush.msra.mxu0 %v97
    %115 = vmatpush.msra.mxu0 %v96
    %116 = vmatpush.msra.mxu0 %v95
    %117 = vmatpush.msra.mxu0 %v94
    %118 = vmatpush.msra.mxu0 %v93
    %119 = vmatpush.msra.mxu0 %v92
    %120 = vmatpush.msra.mxu0 %v91
    %121 = vmatpush.msra.mxu0 %v90
    %122 = vmatpush.msra.mxu0 %v89
    %123 = vmatpush.msra.mxu0 %v88
    %124 = vmatmul.f32.gmra.mxu0 %v106
    %v125 = vpop.f32.mrf.mxu0
    %v126 = vadd.f32 %v102, %v125
    %127 = vdwg.mxu0
    %v128 = vmax.f32 %v126, 0.0
    %v129 = vld [vmem:[#allocation8] sm:$0xff]
    %v130 = vld [vmem:[#allocation8 + $0x8] sm:$0xff]
    %v131 = vld [vmem:[#allocation8 + $0x10] sm:$0xff]
    %v132 = vld [vmem:[#allocation8 + $0x18] sm:$0xff]
    %v133 = vld [vmem:[#allocation8 + $0x20] sm:$0xff]
    %v134 = vld [vmem:[#allocation8 + $0x28] sm:$0xff]
    %v135 = vld [vmem:[#allocation8 + $0x30] sm:$0xff]
    %v136 = vld [vmem:[#allocation8 + $0x38] sm:$0xff]
    %v137 = vld [vmem:[#allocation8 + $0x40] sm:$0xff]
    %v138 = vld [vmem:[#allocation8 + $0x48] sm:$0xff]
    %v139 = vld [vmem:[#allocation8 + $0x50] sm:$0xff]
    %v140 = vld [vmem:[#allocation8 + $0x58] sm:$0xff]
    %v141 = vld [vmem:[#allocation8 + $0x60] sm:$0xff]
    %v142 = vld [vmem:[#allocation8 + $0x68] sm:$0xff]
    %v143 = vld [vmem:[#allocation8 + $0x70] sm:$0xff]
    %v144 = vld [vmem:[#allocation8 + $0x78] sm:$0xff]
    %v145 = vld [vmem:[%s4] sm:$0x1]
    %v147 = vperm.slane %v145, 0
    %149 = vmatpush.msra.mxu0 %v144
    %150 = vmatpush.msra.mxu0 %v143
    %151 = vmatpush.msra.mxu0 %v142
    %152 = vmatpush.msra.mxu0 %v141
    %153 = vmatpush.msra.mxu0 %v140
    %154 = vmatpush.msra.mxu0 %v139
    %155 = vmatpush.msra.mxu0 %v138
    %156 = vmatpush.msra.mxu0 %v137
    %157 = vmatpush.msra.mxu0 %v136
    %158 = vmatpush.msra.mxu0 %v135
    %159 = vmatpush.msra.mxu0 %v134
    %160 = vmatpush.msra.mxu0 %v133
    %161 = vmatpush.msra.mxu0 %v132
    %162 = vmatpush.msra.mxu0 %v131
    %163 = vmatpush.msra.mxu0 %v130
    %164 = vmatpush.msra.mxu0 %v129
    %165 = vmatmul.f32.gmra.mxu0 %v128
    %v166 = vpop.f32.mrf.mxu0
    %v167 = vadd.f32 %v147, %v166
    %168 = vdwg.mxu0
    %v169 = vmax.f32 %v167, 0.0
    %v170 = vld [vmem:[#allocation9] sm:$0xff]
    %s171 = sld [smem:[#allocation2]]
    %172 = vmatpush.xpose.msra.mxu0 0.0
    %173 = vmatpush.xpose.msra.mxu0 0.0
    %174 = vmatpush.xpose.msra.mxu0 0.0
    %175 = vmatpush.xpose.msra.mxu0 0.0
    %176 = vmatpush.xpose.msra.mxu0 0.0
    %177 = vmatpush.xpose.msra.mxu0 0.0
    %178 = vmatpush.xpose.msra.mxu0 0.0
    %179 = vmatpush.xpose.msra.mxu0 0.0
    %180 = vmatpush.xpose.msra.mxu0 0.0
    %181 = vmatpush.xpose.msra.mxu0 0.0
    %182 = vmatpush.xpose.msra.mxu0 0.0
    %183 = vmatpush.xpose.msra.mxu0 0.0
    %184 = vmatpush.xpose.msra.mxu0 0.0
    %185 = vmatpush.xpose.msra.mxu0 0.0
    %186 = vmatpush.xpose.msra.mxu0 0.0
    %187 = vmatpush.xpose.msra.mxu0 %v169
    %188 = vmatmul.f32.gmra.mxu0 %v170
    %v189 = vpop.f32.mrf.mxu0
    %v190 = vadd.f32 0.0, %v189
    %191 = vdwg.mxu0
    %v192 = vstv %s171
    %v193 = vadd.f32 %v190, %v192
    %vm194 = vcmask 57344
    %195 = vst.msk [vmem:[#allocation11] sm:$0x1] %vm194, %v193
    // Predicated region
    $region46: #{simple_regression_forward.1} parent=1 // pred_check
      _
    $region47: #{simple_regression_forward.1} parent=1 // pred_check_branch
      %197 = sbr.rel (0) target = $region49
    $region48: #{simple_regression_forward.1} parent=1 // pred_region
      %199 = vsyncadd [#allocation5], 0
      %s201 = sshll.u32 [#allocation11], 4
      %s202 = int_to_ptr.vmem [resolvable:$true] %s201
      %s203 = sshll.u32 %s7, 4
      %s204 = int_to_ptr.hbm [resolvable:$true] %s203
      %206 = dma.vmem_to_hbm [thread:$0]  %s202, 16, %s204, [#allocation5]
    $region49: #{simple_regression_forward.1} parent=1 // pred_fallthru
      _
    // Predicated region
    $region50: #{simple_regression_forward.1} parent=1 // pred_check
      _
    $region51: #{simple_regression_forward.1} parent=1 // pred_check_branch
      %208 = sbr.rel (0) target = $region53
    $region52: #{simple_regression_forward.1} parent=1 // pred_region
      %210 = dma.done [#allocation5], 16
    $region53: #{simple_regression_forward.1} parent=1 // pred_fallthru
      _
    %211 = vsyncpa [#allocation4], 1
    %212 = vsyncpa [#allocation7], 1
    %213 = vsyncpa [#allocation10], 1
    %214 = vsyncpa [#allocation5], 1

</llo_original>
